<compile_context>
chip_gen: v5e
topology: v5e:2x2
jax: 0.10.0
libtpu: 0.0.40
codegen_flags: <defaults>
</compile_context>

<pallas_src>
import jax
import jax.numpy as jnp
import numpy as np
from jax.experimental import pallas as pl
from jax.experimental.pallas import tpu as pltpu


def _make_kernel(*, seq, layer_dim, hidden, batch_p):
    L, H = layer_dim, hidden
    LH = L * H
    n_wave = seq + L - 1  # wavefront steps

    def kernel(x_ref, h0_ref, c0_ref, wi0_ref, wf_ref, ball_ref,
               fcw_ref, fcb_ref, out_ref, xproj_scr):
        # Pre-loop: layer-0 input projection for ALL timesteps in one MXU call
        # (no recurrent dependency). wi0_wide has zero columns for layers >= 1,
        # so "+ bias_all" also places b_l in every layer's columns.
        xproj_scr[...] = (
            jnp.dot(x_ref[...], wi0_ref[...], preferred_element_type=jnp.float32)
            + ball_ref[...])

        # Hoisted loop invariants (JAX does not CSE repeated ref loads).
        w_fused = wf_ref[...]        # (LH, 4*LH) block-bidiagonal recurrent+input
        bias_all = ball_ref[...]     # (1, 4*LH)

        # All layers share the same initial (h, c) (matches the PyTorch code);
        # the wrapper passes them pre-tiled to (batch_p, LH).
        h_all = h0_ref[...]
        c_all = c0_ref[...]

        # Fully unrolled wavefront loop: one fused matmul per step covers every
        # layer's gates (seq+L-1 dependent MXU steps instead of seq*L).
        for s in range(n_wave):
            pre = (xproj_scr[s * batch_p:(s + 1) * batch_p, :]
                   if s < seq else bias_all)
            gates = jnp.dot(h_all, w_fused,
                            preferred_element_type=jnp.float32) + pre
            # Sigmoid gate columns (i, f, o) were pre-scaled by 0.5 in the
            # wrapper, so a single tanh over the whole 4*LH slab implements
            # sigmoid(x) = 0.5*tanh(x/2)+0.5 for i/f/o and tanh for g.
            t = jnp.tanh(gates)
            i_t = 0.5 * t[:, 0 * LH:1 * LH] + 0.5
            f_t = 0.5 * t[:, 1 * LH:2 * LH] + 0.5
            o_t = 0.5 * t[:, 2 * LH:3 * LH] + 0.5
            g_t = t[:, 3 * LH:4 * LH]
            c_new = f_t * c_all + i_t * g_t
            h_new = o_t * jnp.tanh(c_new)

            lo = max(0, s - seq + 1)   # first active layer at this step
            hi = min(L, s + 1)         # one past last active layer
            if lo == 0 and hi == L:    # steady state: all layers active
                h_all, c_all = h_new, c_new
            else:                      # wavefront head/tail: mask inactive layers
                lane = jax.lax.broadcasted_iota(jnp.int32, (1, LH), 1)
                mask = (lane >= lo * H) & (lane < hi * H)
                h_all = jnp.where(mask, h_new, h_all)
                c_all = jnp.where(mask, c_new, c_all)

        # Final Linear head fused into the kernel (avoids an extra HBM round
        # trip of h_last and a separate XLA dispatch). Lane-sparse masked store.
        h_last = h_all[:, (L - 1) * H:L * H]
        out_ref[...] = (jnp.dot(h_last, fcw_ref[...],
                                preferred_element_type=jnp.float32)
                        + fcb_ref[...])

    return kernel


def pack_params(wis, his, biases, fcw, fcb):
    """One-time packing, eager, OUTSIDE the per-call jitted path.

    Combined gate-column layout (width 4*L*H):
        [ i_0..i_{L-1} | f_0..f_{L-1} | o_0..o_{L-1} | g_0..g_{L-1} ]
    Recurrent + inter-layer input weights are fused into one block-bidiagonal
    (L*H, 4*L*H) matrix: rows of h_l hold Wh_l in layer-l columns and Wi_{l+1}
    in layer-(l+1) columns. Sigmoid (i, f, o) columns are pre-scaled by 0.5 so
    the kernel uses one tanh for everything.
    PyTorch per-layer gate order is [i, f, g, o].
    """
    wis = [np.asarray(w, np.float32) for w in wis]
    his = [np.asarray(w, np.float32) for w in his]
    biases = [np.asarray(b, np.float32) for b in biases]
    L, H = len(wis), his[0].shape[0]
    LH, G = L * H, 4 * L * H
    input_dim = wis[0].shape[0]

    scale = np.ones((4 * H,), np.float32)
    scale[:2 * H] = 0.5          # i, f  (sigmoid)
    scale[3 * H:] = 0.5          # o     (sigmoid);  g stays 1.0

    def cols(l):
        idx = np.empty((4 * H,), np.int64)
        idx[0:H] = 0 * LH + l * H + np.arange(H)           # i_l
        idx[H:2 * H] = 1 * LH + l * H + np.arange(H)        # f_l
        idx[2 * H:3 * H] = 3 * LH + l * H + np.arange(H)    # g_l -> tanh slab
        idx[3 * H:4 * H] = 2 * LH + l * H + np.arange(H)    # o_l
        return idx

    wi0_wide = np.zeros((input_dim, G), np.float32)
    wi0_wide[:, cols(0)] = wis[0] * scale[None, :]

    w_fused = np.zeros((LH, G), np.float32)
    bias_all = np.zeros((1, G), np.float32)
    for l in range(L):
        w_fused[l * H:(l + 1) * H, cols(l)] = his[l] * scale[None, :]   # Wh_l
        if l >= 1:
            w_fused[(l - 1) * H:l * H, cols(l)] = wis[l] * scale[None, :]  # Wi_l
        bias_all[0, cols(l)] = biases[l] * scale
    return (jnp.asarray(wi0_wide), jnp.asarray(w_fused), jnp.asarray(bias_all),
            jnp.asarray(fcw, dtype=jnp.float32),
            jnp.asarray(fcb, dtype=jnp.float32).reshape(1, -1))


@jax.jit
def lstm_model3_forward(x, h0, c0, wi0_wide, w_fused, bias_all, fcw, fcb):
    """x: (batch, seq, input_dim) f32. Returns (batch, output_dim) f32."""
    batch, seq, input_dim = x.shape
    H, out_dim = fcw.shape
    LH, G = w_fused.shape
    L = LH // H

    # Pad batch to the f32 sublane tile (8): full vregs, unmasked row stores.
    batch_p = ((batch + 7) // 8) * 8
    pad = batch_p - batch

    x_sbf = jnp.transpose(x, (1, 0, 2))                          # (seq, batch, in)
    x_flat = jnp.pad(x_sbf, ((0, 0), (0, pad), (0, 0))).reshape(
        seq * batch_p, input_dim)
    h0_all = jnp.tile(jnp.pad(h0, ((0, pad), (0, 0))), (1, L))    # (batch_p, LH)
    c0_all = jnp.tile(jnp.pad(c0, ((0, pad), (0, 0))), (1, L))

    kernel = _make_kernel(seq=seq, layer_dim=L, hidden=H, batch_p=batch_p)

    # Single invocation; every array whole in VMEM (~155 KiB total).
    out_p = pl.pallas_call(
        kernel,
        out_shape=jax.ShapeDtypeStruct((batch_p, out_dim), jnp.float32),
        scratch_shapes=[pltpu.VMEM((seq * batch_p, G), jnp.float32)],
    )(x_flat, h0_all, c0_all, wi0_wide, w_fused, bias_all, fcw, fcb)

    return out_p[:batch]


def reference_forward(x, h0, c0, wis, his, biases, fcw, fcb):
    """Pure-JAX reference, mirrors the PyTorch forward exactly."""
    layer_dim = len(wis)
    hidden = his[0].shape[0]
    xt = jnp.transpose(x, (1, 0, 2))
    hs = [h0 for _ in range(layer_dim)]
    cs = [c0 for _ in range(layer_dim)]
    for t in range(xt.shape[0]):
        inp = xt[t]
        for i in range(layer_dim):
            gates = inp @ wis[i] + hs[i] @ his[i] + biases[i]
            i_t = jax.nn.sigmoid(gates[:, :hidden])
            f_t = jax.nn.sigmoid(gates[:, hidden:2 * hidden])
            g_t = jnp.tanh(gates[:, 2 * hidden:3 * hidden])
            o_t = jax.nn.sigmoid(gates[:, 3 * hidden:])
            cs[i] = f_t * cs[i] + i_t * g_t
            hs[i] = o_t * jnp.tanh(cs[i])
            inp = hs[i]
    return hs[-1] @ fcw + fcb


def xavier_uniform(key, shape):
    fan_in, fan_out = shape
    bound = float(np.sqrt(6.0 / (fan_in + fan_out)))
    return jax.random.uniform(key, shape, jnp.float32, -bound, bound)


if __name__ == "__main__":
    # Small shapes consistent with the module.
    batch, seq = 4, 8
    input_dim, hidden, layer_dim, output_dim = 16, 32, 2, 8

    key = jax.random.PRNGKey(0)
    keys = jax.random.split(key, 3 * layer_dim + 4)

    wis, his, biases = [], [], []
    for i in range(layer_dim):
        in_d = input_dim if i == 0 else hidden
        wis.append(xavier_uniform(keys[3 * i + 0], (in_d, 4 * hidden)))
        his.append(xavier_uniform(keys[3 * i + 1], (hidden, 4 * hidden)))
        biases.append(jnp.zeros((4 * hidden,), jnp.float32))  # ndim<2 -> zeros

    fcw = xavier_uniform(keys[3 * layer_dim], (hidden, output_dim))
    fcb = jnp.zeros((output_dim,), jnp.float32)  # ndim<2 -> zeros

    x = jax.random.normal(keys[3 * layer_dim + 1], (batch, seq, input_dim),
                          jnp.float32)
    # TODO(synk): torch.randn initial hidden state inside forward() ->
    # deterministic jax.random.normal here (RNG is not part of the kernel).
    h0 = jax.random.normal(keys[3 * layer_dim + 2], (batch, hidden), jnp.float32)
    c0 = jax.random.normal(keys[3 * layer_dim + 3], (batch, hidden), jnp.float32)

    # One-time parameter packing outside the per-call path.
    packed = pack_params(wis, his, biases, fcw, fcb)

    out = lstm_model3_forward(x, h0, c0, *packed)
    out = jax.block_until_ready(out)

    ref = reference_forward(x, h0, c0, wis, his, biases, fcw, fcb)
    np.testing.assert_allclose(np.asarray(out), np.asarray(ref),
                               rtol=2e-5, atol=2e-5)
    print("KERNEL_OK")
</pallas_src>

<mosaic_0001>
module attributes {stable_mosaic.version = 11 : i64} {
  func.func @kernel(%arg0: memref<64x16xf32, #tpu.memory_space<vmem>>, %arg1: memref<8x64xf32, #tpu.memory_space<vmem>>, %arg2: memref<8x64xf32, #tpu.memory_space<vmem>>, %arg3: memref<16x256xf32, #tpu.memory_space<vmem>>, %arg4: memref<64x256xf32, #tpu.memory_space<vmem>>, %arg5: memref<1x256xf32, #tpu.memory_space<vmem>>, %arg6: memref<32x8xf32, #tpu.memory_space<vmem>>, %arg7: memref<1x8xf32, #tpu.memory_space<vmem>>, %arg8: memref<8x8xf32, #tpu.memory_space<vmem>>, %arg9: memref<64x256xf32, #tpu.memory_space<vmem>>) attributes {dimension_semantics = [], scalar_prefetch = 0 : i64, scratch_operands = 1 : i64, tpu.core_type = #tpu.core_type<tc>} {
    %c0 = arith.constant 0 : index
    %c0_0 = arith.constant 0 : index
    %0 = vector.load %arg0[%c0, %c0_0] : memref<64x16xf32, #tpu.memory_space<vmem>>, vector<64x16xf32>
    %c0_1 = arith.constant 0 : index
    %c0_2 = arith.constant 0 : index
    %1 = vector.load %arg3[%c0_1, %c0_2] : memref<16x256xf32, #tpu.memory_space<vmem>>, vector<16x256xf32>
    %cst = arith.constant dense<0.000000e+00> : vector<64x256xf32>
    %2 = tpu.matmul %0, %1, %cst {dimension_numbers = #tpu.dot_dimension_numbers<[1], [0], [0], [1], [0, 0, 1, 1], [], []>} : vector<64x16xf32>, vector<16x256xf32>, vector<64x256xf32> -> vector<64x256xf32>
    %c0_3 = arith.constant 0 : index
    %c0_4 = arith.constant 0 : index
    %3 = vector.load %arg5[%c0_3, %c0_4] : memref<1x256xf32, #tpu.memory_space<vmem>>, vector<1x256xf32>
    %4 = vector.broadcast %3 : vector<1x256xf32> to vector<64x256xf32>
    %5 = arith.addf %2, %4 : vector<64x256xf32>
    %c0_5 = arith.constant 0 : index
    %c0_6 = arith.constant 0 : index
    %6 = vector.load %arg9[%c0_5, %c0_6] : memref<64x256xf32, #tpu.memory_space<vmem>>, vector<64x256xf32>
    tpu.vector_store %arg9[%c0_5, %c0_6], %5 {strides = array<i32>} : memref<64x256xf32, #tpu.memory_space<vmem>>, vector<64x256xf32>,
    %c0_7 = arith.constant 0 : index
    %c0_8 = arith.constant 0 : index
    %7 = vector.load %arg4[%c0_7, %c0_8] : memref<64x256xf32, #tpu.memory_space<vmem>>, vector<64x256xf32>
    %c0_9 = arith.constant 0 : index
    %c0_10 = arith.constant 0 : index
    %8 = vector.load %arg5[%c0_9, %c0_10] : memref<1x256xf32, #tpu.memory_space<vmem>>, vector<1x256xf32>
    %c0_11 = arith.constant 0 : index
    %c0_12 = arith.constant 0 : index
    %9 = vector.load %arg1[%c0_11, %c0_12] : memref<8x64xf32, #tpu.memory_space<vmem>>, vector<8x64xf32>
    %c0_13 = arith.constant 0 : index
    %c0_14 = arith.constant 0 : index
    %10 = vector.load %arg2[%c0_13, %c0_14] : memref<8x64xf32, #tpu.memory_space<vmem>>, vector<8x64xf32>
    %c0_15 = arith.constant 0 : index
    %c0_16 = arith.constant 0 : index
    %11 = vector.load %arg9[%c0_15, %c0_16] : memref<64x256xf32, #tpu.memory_space<vmem>>, vector<8x256xf32>
    %cst_17 = arith.constant dense<0.000000e+00> : vector<8x256xf32>
    %12 = tpu.matmul %9, %7, %cst_17 {dimension_numbers = #tpu.dot_dimension_numbers<[1], [0], [0], [1], [0, 0, 1, 1], [], []>} : vector<8x64xf32>, vector<64x256xf32>, vector<8x256xf32> -> vector<8x256xf32>
    %13 = arith.addf %12, %11 : vector<8x256xf32>
    %14 = math.tanh %13 : vector<8x256xf32>
    %15 = vector.extract_strided_slice %14 {offsets = [0, 0], sizes = [8, 64], strides = [1, 1]} : vector<8x256xf32> to vector<8x64xf32>
    %cst_18 = arith.constant 5.000000e-01 : f32
    %16 = vector.broadcast %cst_18 : f32 to vector<8x64xf32>
    %17 = arith.mulf %16, %15 : vector<8x64xf32>
    %cst_19 = arith.constant 5.000000e-01 : f32
    %18 = vector.broadcast %cst_19 : f32 to vector<8x64xf32>
    %19 = arith.addf %17, %18 : vector<8x64xf32>
    %20 = vector.extract_strided_slice %14 {offsets = [0, 64], sizes = [8, 64], strides = [1, 1]} : vector<8x256xf32> to vector<8x64xf32>
    %cst_20 = arith.constant 5.000000e-01 : f32
    %21 = vector.broadcast %cst_20 : f32 to vector<8x64xf32>
    %22 = arith.mulf %21, %20 : vector<8x64xf32>
    %cst_21 = arith.constant 5.000000e-01 : f32
    %23 = vector.broadcast %cst_21 : f32 to vector<8x64xf32>
    %24 = arith.addf %22, %23 : vector<8x64xf32>
    %25 = vector.extract_strided_slice %14 {offsets = [0, 128], sizes = [8, 64], strides = [1, 1]} : vector<8x256xf32> to vector<8x64xf32>
    %cst_22 = arith.constant 5.000000e-01 : f32
    %26 = vector.broadcast %cst_22 : f32 to vector<8x64xf32>
    %27 = arith.mulf %26, %25 : vector<8x64xf32>
    %cst_23 = arith.constant 5.000000e-01 : f32
    %28 = vector.broadcast %cst_23 : f32 to vector<8x64xf32>
    %29 = arith.addf %27, %28 : vector<8x64xf32>
    %30 = vector.extract_strided_slice %14 {offsets = [0, 192], sizes = [8, 64], strides = [1, 1]} : vector<8x256xf32> to vector<8x64xf32>
    %31 = arith.mulf %24, %10 : vector<8x64xf32>
    %32 = arith.mulf %19, %30 : vector<8x64xf32>
    %33 = arith.addf %31, %32 : vector<8x64xf32>
    %34 = math.tanh %33 : vector<8x64xf32>
    %35 = arith.mulf %29, %34 : vector<8x64xf32>
    %36 = tpu.iota {dimensions = array<i32: 1>} : vector<1x64xi32>
    %c0_i32 = arith.constant 0 : i32
    %37 = vector.broadcast %c0_i32 : i32 to vector<1x64xi32>
    %38 = arith.cmpi sge, %36, %37 : vector<1x64xi32>
    %c32_i32 = arith.constant 32 : i32
    %39 = vector.broadcast %c32_i32 : i32 to vector<1x64xi32>
    %40 = arith.cmpi slt, %36, %39 : vector<1x64xi32>
    %41 = arith.andi %38, %40 : vector<1x64xi1>
    %42 = vector.shape_cast %41 : vector<1x64xi1> to vector<1x64xi1>
    %43 = vector.broadcast %42 : vector<1x64xi1> to vector<8x64xi1>
    %44 = arith.select %43, %35, %9 : vector<8x64xi1>, vector<8x64xf32>
    %45 = vector.shape_cast %41 : vector<1x64xi1> to vector<1x64xi1>
    %46 = vector.broadcast %45 : vector<1x64xi1> to vector<8x64xi1>
    %47 = arith.select %46, %33, %10 : vector<8x64xi1>, vector<8x64xf32>
    %c8 = arith.constant 8 : index
    %c0_24 = arith.constant 0 : index
    %48 = vector.load %arg9[%c8, %c0_24] : memref<64x256xf32, #tpu.memory_space<vmem>>, vector<8x256xf32>
    %cst_25 = arith.constant dense<0.000000e+00> : vector<8x256xf32>
    %49 = tpu.matmul %44, %7, %cst_25 {dimension_numbers = #tpu.dot_dimension_numbers<[1], [0], [0], [1], [0, 0, 1, 1], [], []>} : vector<8x64xf32>, vector<64x256xf32>, vector<8x256xf32> -> vector<8x256xf32>
    %50 = arith.addf %49, %48 : vector<8x256xf32>
    %51 = math.tanh %50 : vector<8x256xf32>
    %52 = vector.extract_strided_slice %51 {offsets = [0, 0], sizes = [8, 64], strides = [1, 1]} : vector<8x256xf32> to vector<8x64xf32>
    %cst_26 = arith.constant 5.000000e-01 : f32
    %53 = vector.broadcast %cst_26 : f32 to vector<8x64xf32>
    %54 = arith.mulf %53, %52 : vector<8x64xf32>
    %cst_27 = arith.constant 5.000000e-01 : f32
    %55 = vector.broadcast %cst_27 : f32 to vector<8x64xf32>
    %56 = arith.addf %54, %55 : vector<8x64xf32>
    %57 = vector.extract_strided_slice %51 {offsets = [0, 64], sizes = [8, 64], strides = [1, 1]} : vector<8x256xf32> to vector<8x64xf32>
    %cst_28 = arith.constant 5.000000e-01 : f32
    %58 = vector.broadcast %cst_28 : f32 to vector<8x64xf32>
    %59 = arith.mulf %58, %57 : vector<8x64xf32>
    %cst_29 = arith.constant 5.000000e-01 : f32
    %60 = vector.broadcast %cst_29 : f32 to vector<8x64xf32>
    %61 = arith.addf %59, %60 : vector<8x64xf32>
    %62 = vector.extract_strided_slice %51 {offsets = [0, 128], sizes = [8, 64], strides = [1, 1]} : vector<8x256xf32> to vector<8x64xf32>
    %cst_30 = arith.constant 5.000000e-01 : f32
    %63 = vector.broadcast %cst_30 : f32 to vector<8x64xf32>
    %64 = arith.mulf %63, %62 : vector<8x64xf32>
    %cst_31 = arith.constant 5.000000e-01 : f32
    %65 = vector.broadcast %cst_31 : f32 to vector<8x64xf32>
    %66 = arith.addf %64, %65 : vector<8x64xf32>
    %67 = vector.extract_strided_slice %51 {offsets = [0, 192], sizes = [8, 64], strides = [1, 1]} : vector<8x256xf32> to vector<8x64xf32>
    %68 = arith.mulf %61, %47 : vector<8x64xf32>
    %69 = arith.mulf %56, %67 : vector<8x64xf32>
    %70 = arith.addf %68, %69 : vector<8x64xf32>
    %71 = math.tanh %70 : vector<8x64xf32>
    %72 = arith.mulf %66, %71 : vector<8x64xf32>
    %c16 = arith.constant 16 : index
    %c0_32 = arith.constant 0 : index
    %73 = vector.load %arg9[%c16, %c0_32] : memref<64x256xf32, #tpu.memory_space<vmem>>, vector<8x256xf32>
    %cst_33 = arith.constant dense<0.000000e+00> : vector<8x256xf32>
    %74 = tpu.matmul %72, %7, %cst_33 {dimension_numbers = #tpu.dot_dimension_numbers<[1], [0], [0], [1], [0, 0, 1, 1], [], []>} : vector<8x64xf32>, vector<64x256xf32>, vector<8x256xf32> -> vector<8x256xf32>
    %75 = arith.addf %74, %73 : vector<8x256xf32>
    %76 = math.tanh %75 : vector<8x256xf32>
    %77 = vector.extract_strided_slice %76 {offsets = [0, 0], sizes = [8, 64], strides = [1, 1]} : vector<8x256xf32> to vector<8x64xf32>
    %cst_34 = arith.constant 5.000000e-01 : f32
    %78 = vector.broadcast %cst_34 : f32 to vector<8x64xf32>
    %79 = arith.mulf %78, %77 : vector<8x64xf32>
    %cst_35 = arith.constant 5.000000e-01 : f32
    %80 = vector.broadcast %cst_35 : f32 to vector<8x64xf32>
    %81 = arith.addf %79, %80 : vector<8x64xf32>
    %82 = vector.extract_strided_slice %76 {offsets = [0, 64], sizes = [8, 64], strides = [1, 1]} : vector<8x256xf32> to vector<8x64xf32>
    %cst_36 = arith.constant 5.000000e-01 : f32
    %83 = vector.broadcast %cst_36 : f32 to vector<8x64xf32>
    %84 = arith.mulf %83, %82 : vector<8x64xf32>
    %cst_37 = arith.constant 5.000000e-01 : f32
    %85 = vector.broadcast %cst_37 : f32 to vector<8x64xf32>
    %86 = arith.addf %84, %85 : vector<8x64xf32>
    %87 = vector.extract_strided_slice %76 {offsets = [0, 128], sizes = [8, 64], strides = [1, 1]} : vector<8x256xf32> to vector<8x64xf32>
    %cst_38 = arith.constant 5.000000e-01 : f32
    %88 = vector.broadcast %cst_38 : f32 to vector<8x64xf32>
    %89 = arith.mulf %88, %87 : vector<8x64xf32>
    %cst_39 = arith.constant 5.000000e-01 : f32
    %90 = vector.broadcast %cst_39 : f32 to vector<8x64xf32>
    %91 = arith.addf %89, %90 : vector<8x64xf32>
    %92 = vector.extract_strided_slice %76 {offsets = [0, 192], sizes = [8, 64], strides = [1, 1]} : vector<8x256xf32> to vector<8x64xf32>
    %93 = arith.mulf %86, %70 : vector<8x64xf32>
    %94 = arith.mulf %81, %92 : vector<8x64xf32>
    %95 = arith.addf %93, %94 : vector<8x64xf32>
    %96 = math.tanh %95 : vector<8x64xf32>
    %97 = arith.mulf %91, %96 : vector<8x64xf32>
    %c24 = arith.constant 24 : index
    %c0_40 = arith.constant 0 : index
    %98 = vector.load %arg9[%c24, %c0_40] : memref<64x256xf32, #tpu.memory_space<vmem>>, vector<8x256xf32>
    %cst_41 = arith.constant dense<0.000000e+00> : vector<8x256xf32>
    %99 = tpu.matmul %97, %7, %cst_41 {dimension_numbers = #tpu.dot_dimension_numbers<[1], [0], [0], [1], [0, 0, 1, 1], [], []>} : vector<8x64xf32>, vector<64x256xf32>, vector<8x256xf32> -> vector<8x256xf32>
    %100 = arith.addf %99, %98 : vector<8x256xf32>
    %101 = math.tanh %100 : vector<8x256xf32>
    %102 = vector.extract_strided_slice %101 {offsets = [0, 0], sizes = [8, 64], strides = [1, 1]} : vector<8x256xf32> to vector<8x64xf32>
    %cst_42 = arith.constant 5.000000e-01 : f32
    %103 = vector.broadcast %cst_42 : f32 to vector<8x64xf32>
    %104 = arith.mulf %103, %102 : vector<8x64xf32>
    %cst_43 = arith.constant 5.000000e-01 : f32
    %105 = vector.broadcast %cst_43 : f32 to vector<8x64xf32>
    %106 = arith.addf %104, %105 : vector<8x64xf32>
    %107 = vector.extract_strided_slice %101 {offsets = [0, 64], sizes = [8, 64], strides = [1, 1]} : vector<8x256xf32> to vector<8x64xf32>
    %cst_44 = arith.constant 5.000000e-01 : f32
    %108 = vector.broadcast %cst_44 : f32 to vector<8x64xf32>
    %109 = arith.mulf %108, %107 : vector<8x64xf32>
    %cst_45 = arith.constant 5.000000e-01 : f32
    %110 = vector.broadcast %cst_45 : f32 to vector<8x64xf32>
    %111 = arith.addf %109, %110 : vector<8x64xf32>
    %112 = vector.extract_strided_slice %101 {offsets = [0, 128], sizes = [8, 64], strides = [1, 1]} : vector<8x256xf32> to vector<8x64xf32>
    %cst_46 = arith.constant 5.000000e-01 : f32
    %113 = vector.broadcast %cst_46 : f32 to vector<8x64xf32>
    %114 = arith.mulf %113, %112 : vector<8x64xf32>
    %cst_47 = arith.constant 5.000000e-01 : f32
    %115 = vector.broadcast %cst_47 : f32 to vector<8x64xf32>
    %116 = arith.addf %114, %115 : vector<8x64xf32>
    %117 = vector.extract_strided_slice %101 {offsets = [0, 192], sizes = [8, 64], strides = [1, 1]} : vector<8x256xf32> to vector<8x64xf32>
    %118 = arith.mulf %111, %95 : vector<8x64xf32>
    %119 = arith.mulf %106, %117 : vector<8x64xf32>
    %120 = arith.addf %118, %119 : vector<8x64xf32>
    %121 = math.tanh %120 : vector<8x64xf32>
    %122 = arith.mulf %116, %121 : vector<8x64xf32>
    %c32 = arith.constant 32 : index
    %c0_48 = arith.constant 0 : index
    %123 = vector.load %arg9[%c32, %c0_48] : memref<64x256xf32, #tpu.memory_space<vmem>>, vector<8x256xf32>
    %cst_49 = arith.constant dense<0.000000e+00> : vector<8x256xf32>
    %124 = tpu.matmul %122, %7, %cst_49 {dimension_numbers = #tpu.dot_dimension_numbers<[1], [0], [0], [1], [0, 0, 1, 1], [], []>} : vector<8x64xf32>, vector<64x256xf32>, vector<8x256xf32> -> vector<8x256xf32>
    %125 = arith.addf %124, %123 : vector<8x256xf32>
    %126 = math.tanh %125 : vector<8x256xf32>
    %127 = vector.extract_strided_slice %126 {offsets = [0, 0], sizes = [8, 64], strides = [1, 1]} : vector<8x256xf32> to vector<8x64xf32>
    %cst_50 = arith.constant 5.000000e-01 : f32
    %128 = vector.broadcast %cst_50 : f32 to vector<8x64xf32>
    %129 = arith.mulf %128, %127 : vector<8x64xf32>
    %cst_51 = arith.constant 5.000000e-01 : f32
    %130 = vector.broadcast %cst_51 : f32 to vector<8x64xf32>
    %131 = arith.addf %129, %130 : vector<8x64xf32>
    %132 = vector.extract_strided_slice %126 {offsets = [0, 64], sizes = [8, 64], strides = [1, 1]} : vector<8x256xf32> to vector<8x64xf32>
    %cst_52 = arith.constant 5.000000e-01 : f32
    %133 = vector.broadcast %cst_52 : f32 to vector<8x64xf32>
    %134 = arith.mulf %133, %132 : vector<8x64xf32>
    %cst_53 = arith.constant 5.000000e-01 : f32
    %135 = vector.broadcast %cst_53 : f32 to vector<8x64xf32>
    %136 = arith.addf %134, %135 : vector<8x64xf32>
    %137 = vector.extract_strided_slice %126 {offsets = [0, 128], sizes = [8, 64], strides = [1, 1]} : vector<8x256xf32> to vector<8x64xf32>
    %cst_54 = arith.constant 5.000000e-01 : f32
    %138 = vector.broadcast %cst_54 : f32 to vector<8x64xf32>
    %139 = arith.mulf %138, %137 : vector<8x64xf32>
    %cst_55 = arith.constant 5.000000e-01 : f32
    %140 = vector.broadcast %cst_55 : f32 to vector<8x64xf32>
    %141 = arith.addf %139, %140 : vector<8x64xf32>
    %142 = vector.extract_strided_slice %126 {offsets = [0, 192], sizes = [8, 64], strides = [1, 1]} : vector<8x256xf32> to vector<8x64xf32>
    %143 = arith.mulf %136, %120 : vector<8x64xf32>
    %144 = arith.mulf %131, %142 : vector<8x64xf32>
    %145 = arith.addf %143, %144 : vector<8x64xf32>
    %146 = math.tanh %145 : vector<8x64xf32>
    %147 = arith.mulf %141, %146 : vector<8x64xf32>
    %c40 = arith.constant 40 : index
    %c0_56 = arith.constant 0 : index
    %148 = vector.load %arg9[%c40, %c0_56] : memref<64x256xf32, #tpu.memory_space<vmem>>, vector<8x256xf32>
    %cst_57 = arith.constant dense<0.000000e+00> : vector<8x256xf32>
    %149 = tpu.matmul %147, %7, %cst_57 {dimension_numbers = #tpu.dot_dimension_numbers<[1], [0], [0], [1], [0, 0, 1, 1], [], []>} : vector<8x64xf32>, vector<64x256xf32>, vector<8x256xf32> -> vector<8x256xf32>
    %150 = arith.addf %149, %148 : vector<8x256xf32>
    %151 = math.tanh %150 : vector<8x256xf32>
    %152 = vector.extract_strided_slice %151 {offsets = [0, 0], sizes = [8, 64], strides = [1, 1]} : vector<8x256xf32> to vector<8x64xf32>
    %cst_58 = arith.constant 5.000000e-01 : f32
    %153 = vector.broadcast %cst_58 : f32 to vector<8x64xf32>
    %154 = arith.mulf %153, %152 : vector<8x64xf32>
    %cst_59 = arith.constant 5.000000e-01 : f32
    %155 = vector.broadcast %cst_59 : f32 to vector<8x64xf32>
    %156 = arith.addf %154, %155 : vector<8x64xf32>
    %157 = vector.extract_strided_slice %151 {offsets = [0, 64], sizes = [8, 64], strides = [1, 1]} : vector<8x256xf32> to vector<8x64xf32>
    %cst_60 = arith.constant 5.000000e-01 : f32
    %158 = vector.broadcast %cst_60 : f32 to vector<8x64xf32>
    %159 = arith.mulf %158, %157 : vector<8x64xf32>
    %cst_61 = arith.constant 5.000000e-01 : f32
    %160 = vector.broadcast %cst_61 : f32 to vector<8x64xf32>
    %161 = arith.addf %159, %160 : vector<8x64xf32>
    %162 = vector.extract_strided_slice %151 {offsets = [0, 128], sizes = [8, 64], strides = [1, 1]} : vector<8x256xf32> to vector<8x64xf32>
    %cst_62 = arith.constant 5.000000e-01 : f32
    %163 = vector.broadcast %cst_62 : f32 to vector<8x64xf32>
    %164 = arith.mulf %163, %162 : vector<8x64xf32>
    %cst_63 = arith.constant 5.000000e-01 : f32
    %165 = vector.broadcast %cst_63 : f32 to vector<8x64xf32>
    %166 = arith.addf %164, %165 : vector<8x64xf32>
    %167 = vector.extract_strided_slice %151 {offsets = [0, 192], sizes = [8, 64], strides = [1, 1]} : vector<8x256xf32> to vector<8x64xf32>
    %168 = arith.mulf %161, %145 : vector<8x64xf32>
    %169 = arith.mulf %156, %167 : vector<8x64xf32>
    %170 = arith.addf %168, %169 : vector<8x64xf32>
    %171 = math.tanh %170 : vector<8x64xf32>
    %172 = arith.mulf %166, %171 : vector<8x64xf32>
    %c48 = arith.constant 48 : index
    %c0_64 = arith.constant 0 : index
    %173 = vector.load %arg9[%c48, %c0_64] : memref<64x256xf32, #tpu.memory_space<vmem>>, vector<8x256xf32>
    %cst_65 = arith.constant dense<0.000000e+00> : vector<8x256xf32>
    %174 = tpu.matmul %172, %7, %cst_65 {dimension_numbers = #tpu.dot_dimension_numbers<[1], [0], [0], [1], [0, 0, 1, 1], [], []>} : vector<8x64xf32>, vector<64x256xf32>, vector<8x256xf32> -> vector<8x256xf32>
    %175 = arith.addf %174, %173 : vector<8x256xf32>
    %176 = math.tanh %175 : vector<8x256xf32>
    %177 = vector.extract_strided_slice %176 {offsets = [0, 0], sizes = [8, 64], strides = [1, 1]} : vector<8x256xf32> to vector<8x64xf32>
    %cst_66 = arith.constant 5.000000e-01 : f32
    %178 = vector.broadcast %cst_66 : f32 to vector<8x64xf32>
    %179 = arith.mulf %178, %177 : vector<8x64xf32>
    %cst_67 = arith.constant 5.000000e-01 : f32
    %180 = vector.broadcast %cst_67 : f32 to vector<8x64xf32>
    %181 = arith.addf %179, %180 : vector<8x64xf32>
    %182 = vector.extract_strided_slice %176 {offsets = [0, 64], sizes = [8, 64], strides = [1, 1]} : vector<8x256xf32> to vector<8x64xf32>
    %cst_68 = arith.constant 5.000000e-01 : f32
    %183 = vector.broadcast %cst_68 : f32 to vector<8x64xf32>
    %184 = arith.mulf %183, %182 : vector<8x64xf32>
    %cst_69 = arith.constant 5.000000e-01 : f32
    %185 = vector.broadcast %cst_69 : f32 to vector<8x64xf32>
    %186 = arith.addf %184, %185 : vector<8x64xf32>
    %187 = vector.extract_strided_slice %176 {offsets = [0, 128], sizes = [8, 64], strides = [1, 1]} : vector<8x256xf32> to vector<8x64xf32>
    %cst_70 = arith.constant 5.000000e-01 : f32
    %188 = vector.broadcast %cst_70 : f32 to vector<8x64xf32>
    %189 = arith.mulf %188, %187 : vector<8x64xf32>
    %cst_71 = arith.constant 5.000000e-01 : f32
    %190 = vector.broadcast %cst_71 : f32 to vector<8x64xf32>
    %191 = arith.addf %189, %190 : vector<8x64xf32>
    %192 = vector.extract_strided_slice %176 {offsets = [0, 192], sizes = [8, 64], strides = [1, 1]} : vector<8x256xf32> to vector<8x64xf32>
    %193 = arith.mulf %186, %170 : vector<8x64xf32>
    %194 = arith.mulf %181, %192 : vector<8x64xf32>
    %195 = arith.addf %193, %194 : vector<8x64xf32>
    %196 = math.tanh %195 : vector<8x64xf32>
    %197 = arith.mulf %191, %196 : vector<8x64xf32>
    %c56 = arith.constant 56 : index
    %c0_72 = arith.constant 0 : index
    %198 = vector.load %arg9[%c56, %c0_72] : memref<64x256xf32, #tpu.memory_space<vmem>>, vector<8x256xf32>
    %cst_73 = arith.constant dense<0.000000e+00> : vector<8x256xf32>
    %199 = tpu.matmul %197, %7, %cst_73 {dimension_numbers = #tpu.dot_dimension_numbers<[1], [0], [0], [1], [0, 0, 1, 1], [], []>} : vector<8x64xf32>, vector<64x256xf32>, vector<8x256xf32> -> vector<8x256xf32>
    %200 = arith.addf %199, %198 : vector<8x256xf32>
    %201 = math.tanh %200 : vector<8x256xf32>
    %202 = vector.extract_strided_slice %201 {offsets = [0, 0], sizes = [8, 64], strides = [1, 1]} : vector<8x256xf32> to vector<8x64xf32>
    %cst_74 = arith.constant 5.000000e-01 : f32
    %203 = vector.broadcast %cst_74 : f32 to vector<8x64xf32>
    %204 = arith.mulf %203, %202 : vector<8x64xf32>
    %cst_75 = arith.constant 5.000000e-01 : f32
    %205 = vector.broadcast %cst_75 : f32 to vector<8x64xf32>
    %206 = arith.addf %204, %205 : vector<8x64xf32>
    %207 = vector.extract_strided_slice %201 {offsets = [0, 64], sizes = [8, 64], strides = [1, 1]} : vector<8x256xf32> to vector<8x64xf32>
    %cst_76 = arith.constant 5.000000e-01 : f32
    %208 = vector.broadcast %cst_76 : f32 to vector<8x64xf32>
    %209 = arith.mulf %208, %207 : vector<8x64xf32>
    %cst_77 = arith.constant 5.000000e-01 : f32
    %210 = vector.broadcast %cst_77 : f32 to vector<8x64xf32>
    %211 = arith.addf %209, %210 : vector<8x64xf32>
    %212 = vector.extract_strided_slice %201 {offsets = [0, 128], sizes = [8, 64], strides = [1, 1]} : vector<8x256xf32> to vector<8x64xf32>
    %cst_78 = arith.constant 5.000000e-01 : f32
    %213 = vector.broadcast %cst_78 : f32 to vector<8x64xf32>
    %214 = arith.mulf %213, %212 : vector<8x64xf32>
    %cst_79 = arith.constant 5.000000e-01 : f32
    %215 = vector.broadcast %cst_79 : f32 to vector<8x64xf32>
    %216 = arith.addf %214, %215 : vector<8x64xf32>
    %217 = vector.extract_strided_slice %201 {offsets = [0, 192], sizes = [8, 64], strides = [1, 1]} : vector<8x256xf32> to vector<8x64xf32>
    %218 = arith.mulf %211, %195 : vector<8x64xf32>
    %219 = arith.mulf %206, %217 : vector<8x64xf32>
    %220 = arith.addf %218, %219 : vector<8x64xf32>
    %221 = math.tanh %220 : vector<8x64xf32>
    %222 = arith.mulf %216, %221 : vector<8x64xf32>
    %cst_80 = arith.constant dense<0.000000e+00> : vector<8x256xf32>
    %223 = tpu.matmul %222, %7, %cst_80 {dimension_numbers = #tpu.dot_dimension_numbers<[1], [0], [0], [1], [0, 0, 1, 1], [], []>} : vector<8x64xf32>, vector<64x256xf32>, vector<8x256xf32> -> vector<8x256xf32>
    %224 = vector.broadcast %8 : vector<1x256xf32> to vector<8x256xf32>
    %225 = arith.addf %223, %224 : vector<8x256xf32>
    %226 = math.tanh %225 : vector<8x256xf32>
    %227 = vector.extract_strided_slice %226 {offsets = [0, 0], sizes = [8, 64], strides = [1, 1]} : vector<8x256xf32> to vector<8x64xf32>
    %cst_81 = arith.constant 5.000000e-01 : f32
    %228 = vector.broadcast %cst_81 : f32 to vector<8x64xf32>
    %229 = arith.mulf %228, %227 : vector<8x64xf32>
    %cst_82 = arith.constant 5.000000e-01 : f32
    %230 = vector.broadcast %cst_82 : f32 to vector<8x64xf32>
    %231 = arith.addf %229, %230 : vector<8x64xf32>
    %232 = vector.extract_strided_slice %226 {offsets = [0, 64], sizes = [8, 64], strides = [1, 1]} : vector<8x256xf32> to vector<8x64xf32>
    %cst_83 = arith.constant 5.000000e-01 : f32
    %233 = vector.broadcast %cst_83 : f32 to vector<8x64xf32>
    %234 = arith.mulf %233, %232 : vector<8x64xf32>
    %cst_84 = arith.constant 5.000000e-01 : f32
    %235 = vector.broadcast %cst_84 : f32 to vector<8x64xf32>
    %236 = arith.addf %234, %235 : vector<8x64xf32>
    %237 = vector.extract_strided_slice %226 {offsets = [0, 128], sizes = [8, 64], strides = [1, 1]} : vector<8x256xf32> to vector<8x64xf32>
    %cst_85 = arith.constant 5.000000e-01 : f32
    %238 = vector.broadcast %cst_85 : f32 to vector<8x64xf32>
    %239 = arith.mulf %238, %237 : vector<8x64xf32>
    %cst_86 = arith.constant 5.000000e-01 : f32
    %240 = vector.broadcast %cst_86 : f32 to vector<8x64xf32>
    %241 = arith.addf %239, %240 : vector<8x64xf32>
    %242 = vector.extract_strided_slice %226 {offsets = [0, 192], sizes = [8, 64], strides = [1, 1]} : vector<8x256xf32> to vector<8x64xf32>
    %243 = arith.mulf %236, %220 : vector<8x64xf32>
    %244 = arith.mulf %231, %242 : vector<8x64xf32>
    %245 = arith.addf %243, %244 : vector<8x64xf32>
    %246 = math.tanh %245 : vector<8x64xf32>
    %247 = arith.mulf %241, %246 : vector<8x64xf32>
    %248 = tpu.iota {dimensions = array<i32: 1>} : vector<1x64xi32>
    %c32_i32_87 = arith.constant 32 : i32
    %249 = vector.broadcast %c32_i32_87 : i32 to vector<1x64xi32>
    %250 = arith.cmpi sge, %248, %249 : vector<1x64xi32>
    %c64_i32 = arith.constant 64 : i32
    %251 = vector.broadcast %c64_i32 : i32 to vector<1x64xi32>
    %252 = arith.cmpi slt, %248, %251 : vector<1x64xi32>
    %253 = arith.andi %250, %252 : vector<1x64xi1>
    %254 = vector.shape_cast %253 : vector<1x64xi1> to vector<1x64xi1>
    %255 = vector.broadcast %254 : vector<1x64xi1> to vector<8x64xi1>
    %256 = arith.select %255, %247, %222 : vector<8x64xi1>, vector<8x64xf32>
    %257 = vector.extract_strided_slice %256 {offsets = [0, 32], sizes = [8, 32], strides = [1, 1]} : vector<8x64xf32> to vector<8x32xf32>
    %c0_88 = arith.constant 0 : index
    %c0_89 = arith.constant 0 : index
    %258 = vector.load %arg6[%c0_88, %c0_89] : memref<32x8xf32, #tpu.memory_space<vmem>>, vector<32x8xf32>
    %cst_90 = arith.constant dense<0.000000e+00> : vector<8x8xf32>
    %259 = tpu.matmul %257, %258, %cst_90 {dimension_numbers = #tpu.dot_dimension_numbers<[1], [0], [0], [1], [0, 0, 1, 1], [], []>} : vector<8x32xf32>, vector<32x8xf32>, vector<8x8xf32> -> vector<8x8xf32>
    %c0_91 = arith.constant 0 : index
    %c0_92 = arith.constant 0 : index
    %260 = vector.load %arg7[%c0_91, %c0_92] : memref<1x8xf32, #tpu.memory_space<vmem>>, vector<1x8xf32>
    %261 = vector.broadcast %260 : vector<1x8xf32> to vector<8x8xf32>
    %262 = arith.addf %259, %261 : vector<8x8xf32>
    %c0_93 = arith.constant 0 : index
    %c0_94 = arith.constant 0 : index
    %263 = vector.load %arg8[%c0_93, %c0_94] : memref<8x8xf32, #tpu.memory_space<vmem>>, vector<8x8xf32>
    tpu.vector_store %arg8[%c0_93, %c0_94], %262 {strides = array<i32>} : memref<8x8xf32, #tpu.memory_space<vmem>>, vector<8x8xf32>,
    return
  }
}

</mosaic_0001>

<llo_original>
// kernel: tile.14
$region0: #{tile.14}
  %s0 = inlined_call_operand.vmem [shape: f32[8,2,32], index: 0, kind: input, shape index: {}]
  %s1 = inlined_call_operand.vmem [shape: f32[8,64], index: 1, kind: output, shape index: {}]
  $region1: #{tile.14} parent=0
    #allocation0 [shape = 'u8[32768]{0}', space=vmem, size = 0x8000, scoped, tag = 'scoped mem for input reshape']
    %s3 = ssub.s32 4, 1
    %s4 = scalar_lea.vmem %s0, 14
    %v5 = vld [vmem:[%s4] sm:%s3]
    %s6 = scalar_lea.vmem [#allocation0], 56
    %7 = vst [vmem:[%s6] sm:%s3] %v5
    %s8 = scalar_lea.vmem %s0, 12
    %v9 = vld [vmem:[%s8] sm:%s3]
    %s10 = scalar_lea.vmem [#allocation0], 48
    %11 = vst [vmem:[%s10] sm:%s3] %v9
    %s12 = scalar_lea.vmem %s0, 10
    %v13 = vld [vmem:[%s12] sm:%s3]
    %s14 = scalar_lea.vmem [#allocation0], 40
    %15 = vst [vmem:[%s14] sm:%s3] %v13
    %s16 = scalar_lea.vmem %s0, 8
    %v17 = vld [vmem:[%s16] sm:%s3]
    %s18 = scalar_lea.vmem [#allocation0], 32
    %19 = vst [vmem:[%s18] sm:%s3] %v17
    %s20 = scalar_lea.vmem %s0, 6
    %v21 = vld [vmem:[%s20] sm:%s3]
    %s22 = scalar_lea.vmem [#allocation0], 24
    %23 = vst [vmem:[%s22] sm:%s3] %v21
    %s24 = scalar_lea.vmem %s0, 4
    %v25 = vld [vmem:[%s24] sm:%s3]
    %s26 = scalar_lea.vmem [#allocation0], 16
    %27 = vst [vmem:[%s26] sm:%s3] %v25
    %s28 = scalar_lea.vmem %s0, 2
    %v29 = vld [vmem:[%s28] sm:%s3]
    %s30 = scalar_lea.vmem [#allocation0], 8
    %31 = vst [vmem:[%s30] sm:%s3] %v29
    %v32 = vld [vmem:[%s0] sm:%s3]
    %33 = vst [vmem:[#allocation0] sm:%s3] %v32
    %v34 = vld [vmem:[#allocation0] ss:$8 sm:$0xf]
    %v35 = vld [vmem:[#allocation0] ss:$8 sm:$0xf0]
    %vm36 = vcmask 1047556
    %v37 = vsel %vm36, %v35, %v34
    %vm38 = vcmask 261120
    %39 = vst.msk [vmem:[%s1] sm:$0xff] %vm38, %v37
    %s40 = scalar_lea.vmem [#allocation0], 1
    %v41 = vld [vmem:[%s40] ss:$8 sm:$0xf]
    %s42 = scalar_lea.vmem [#allocation0], 1
    %v43 = vld [vmem:[%s42] ss:$8 sm:$0xf0]
    %vm44 = vcmask 1047556
    %v45 = vsel %vm44, %v43, %v41
    %46 = vrot.lane.b32.xlu0 %v45, 32
    %v47 = vpop.permute.xlu0 %46
    %vm48 = vcmask 523520
    %49 = vst.msk [vmem:[%s1] sm:$0xff] %vm48, %v47

// kernel: lstm_model3_forward.1
$region0: #{lstm_model3_forward.1}
  #allocation0 [shape = 'u32[]', space=smem, size = 0x4, offset = 0x4, fixed_abs, tag = 'smem constant byte address 0x4 - core index']
  #allocation1 [shape = 'u32[72,128]{1,0:T(1,128)}', space=vmem, size = 0x9000, scoped, tag = 'internal scratch']
  #allocation2 [shape = 'f32[64,256]{1,0:T(8,128)}', space=vmem, size = 0x10000, scoped, tag = 'scratch operand']
  %s0 = inlined_call_operand.vmem [shape: f32[64,16], index: 0, kind: input, shape index: {}]
  %s1 = inlined_call_operand.vmem [shape: f32[8,64], index: 1, kind: input, shape index: {}]
  %s2 = inlined_call_operand.vmem [shape: f32[8,64], index: 2, kind: input, shape index: {}]
  %s3 = inlined_call_operand.vmem [shape: f32[16,256], index: 3, kind: input, shape index: {}]
  %s4 = inlined_call_operand.vmem [shape: f32[64,256], index: 4, kind: input, shape index: {}]
  %s5 = inlined_call_operand.vmem [shape: f32[1,256], index: 5, kind: input, shape index: {}]
  %s6 = inlined_call_operand.vmem [shape: f32[32,8], index: 6, kind: input, shape index: {}]
  %s7 = inlined_call_operand.vmem [shape: f32[1,8], index: 7, kind: input, shape index: {}]
  %s8 = inlined_call_operand.vmem [shape: f32[8,8], index: 8, kind: output, shape index: {}]
  %s9 = sld [smem:[#allocation0]]
  $region42: #{lstm_model3_forward.1} parent=0
    _
  %s11 = ssub.s32 1, %s9
  %s12 = scalar_select 0, %s11, %s9
  // Predicated region
  $region2: #{lstm_model3_forward.1} parent=0 // pred_check
    _
  $region3: #{lstm_model3_forward.1} parent=0 // pred_check_branch
    %14 = sbr.rel (0) target = $region5
  $region4: #{lstm_model3_forward.1} parent=0 // pred_region
    _
  $region5: #{lstm_model3_forward.1} parent=0 // pred_fallthru
    _
  // Predicated region
  $region6: #{lstm_model3_forward.1} parent=0 // pred_check
    _
  $region7: #{lstm_model3_forward.1} parent=0 // pred_check_branch
    %16 = sbr.rel (0) target = $region9
  $region8: #{lstm_model3_forward.1} parent=0 // pred_region
    _
  $region9: #{lstm_model3_forward.1} parent=0 // pred_fallthru
    _
  // Predicated region
  $region10: #{lstm_model3_forward.1} parent=0 // pred_check
    _
  $region11: #{lstm_model3_forward.1} parent=0 // pred_check_branch
    %18 = sbr.rel (0) target = $region13
  $region12: #{lstm_model3_forward.1} parent=0 // pred_region
    _
  $region13: #{lstm_model3_forward.1} parent=0 // pred_fallthru
    _
  // Predicated region
  $region14: #{lstm_model3_forward.1} parent=0 // pred_check
    _
  $region15: #{lstm_model3_forward.1} parent=0 // pred_check_branch
    %20 = sbr.rel (0) target = $region17
  $region16: #{lstm_model3_forward.1} parent=0 // pred_region
    _
  $region17: #{lstm_model3_forward.1} parent=0 // pred_fallthru
    _
  // Predicated region
  $region18: #{lstm_model3_forward.1} parent=0 // pred_check
    _
  $region19: #{lstm_model3_forward.1} parent=0 // pred_check_branch
    %22 = sbr.rel (0) target = $region21
  $region20: #{lstm_model3_forward.1} parent=0 // pred_region
    _
  $region21: #{lstm_model3_forward.1} parent=0 // pred_fallthru
    _
  // Predicated region
  $region22: #{lstm_model3_forward.1} parent=0 // pred_check
    _
  $region23: #{lstm_model3_forward.1} parent=0 // pred_check_branch
    %24 = sbr.rel (0) target = $region25
  $region24: #{lstm_model3_forward.1} parent=0 // pred_region
    _
  $region25: #{lstm_model3_forward.1} parent=0 // pred_fallthru
    _
  // Predicated region
  $region26: #{lstm_model3_forward.1} parent=0 // pred_check
    _
  $region27: #{lstm_model3_forward.1} parent=0 // pred_check_branch
    %26 = sbr.rel (0) target = $region29
  $region28: #{lstm_model3_forward.1} parent=0 // pred_region
    _
  $region29: #{lstm_model3_forward.1} parent=0 // pred_fallthru
    _
  // Predicated region
  $region30: #{lstm_model3_forward.1} parent=0 // pred_check
    _
  $region31: #{lstm_model3_forward.1} parent=0 // pred_check_branch
    %28 = sbr.rel (0) target = $region33
  $region32: #{lstm_model3_forward.1} parent=0 // pred_region
    _
  $region33: #{lstm_model3_forward.1} parent=0 // pred_fallthru
    _
  %v29 = vld [vmem:[%s0] sm:$0xff]
  %v30 = vld [vmem:[%s0 + $0x8] sm:$0xff]
  %v31 = vld [vmem:[%s0 + $0x10] sm:$0xff]
  %v32 = vld [vmem:[%s0 + $0x18] sm:$0xff]
  %v33 = vld [vmem:[%s0 + $0x20] sm:$0xff]
  %v34 = vld [vmem:[%s0 + $0x28] sm:$0xff]
  %v35 = vld [vmem:[%s0 + $0x30] sm:$0xff]
  %v36 = vld [vmem:[%s0 + $0x38] sm:$0xff]
  %v37 = vld [vmem:[%s3] sm:$0xff]
  %v38 = vld [vmem:[%s3 + $0x8] sm:$0xff]
  %v39 = vld [vmem:[%s3 + $0x10] sm:$0xff]
  %v40 = vld [vmem:[%s3 + $0x18] sm:$0xff]
  %v41 = vld [vmem:[%s5] sm:$0x3]
  %v43 = vperm.slane %v41, 0
  %v44 = vperm.slane %v41, 1
  %vm47 = vcmask 130048
  %v49 = vsel %vm47, %v29, 0
  %v52 = vsel %vm47, %v30, 0
  %v55 = vsel %vm47, %v31, 0
  %v58 = vsel %vm47, %v32, 0
  %v61 = vsel %vm47, %v33, 0
  %v64 = vsel %vm47, %v34, 0
  %v67 = vsel %vm47, %v35, 0
  %v70 = vsel %vm47, %v36, 0
  %72 = vmatpush.msra.mxu0 0.0
  %73 = vmatpush.msra.mxu0 0.0
  %74 = vmatpush.msra.mxu0 0.0
  %75 = vmatpush.msra.mxu0 0.0
  %76 = vmatpush.msra.mxu0 0.0
  %77 = vmatpush.msra.mxu0 0.0
  %78 = vmatpush.msra.mxu0 0.0
  %79 = vmatpush.msra.mxu0 0.0
  %80 = vmatpush.msra.mxu0 0.0
  %81 = vmatpush.msra.mxu0 0.0
  %82 = vmatpush.msra.mxu0 0.0
  %83 = vmatpush.msra.mxu0 0.0
  %84 = vmatpush.msra.mxu0 0.0
  %85 = vmatpush.msra.mxu0 0.0
  %86 = vmatpush.msra.mxu0 %v39
  %87 = vmatpush.msra.mxu0 %v37
  %88 = vmatmul.f32.gmra.mxu0 %v49
  %v89 = vpop.f32.mrf.mxu0
  %v90 = vadd.f32 %v43, %v89
  %91 = vmatmul.f32.gmra.mxu0 %v52
  %v92 = vpop.f32.mrf.mxu0
  %v93 = vadd.f32 %v43, %v92
  %94 = vmatmul.f32.gmra.mxu0 %v55
  %v95 = vpop.f32.mrf.mxu0
  %v96 = vadd.f32 %v43, %v95
  %97 = vmatmul.f32.gmra.mxu0 %v58
  %v98 = vpop.f32.mrf.mxu0
  %v99 = vadd.f32 %v43, %v98
  %100 = vmatmul.f32.gmra.mxu0 %v61
  %v101 = vpop.f32.mrf.mxu0
  %v102 = vadd.f32 %v43, %v101
  %103 = vmatmul.f32.gmra.mxu0 %v64
  %v104 = vpop.f32.mrf.mxu0
  %v105 = vadd.f32 %v43, %v104
  %106 = vmatmul.f32.gmra.mxu0 %v67
  %v107 = vpop.f32.mrf.mxu0
  %v108 = vadd.f32 %v43, %v107
  %109 = vmatmul.f32.gmra.mxu0 %v70
  %v110 = vpop.f32.mrf.mxu0
  %v111 = vadd.f32 %v43, %v110
  %112 = vdwg.mxu0
  %113 = vmatpush.msra.mxu0 0.0
  %114 = vmatpush.msra.mxu0 0.0
  %115 = vmatpush.msra.mxu0 0.0
  %116 = vmatpush.msra.mxu0 0.0
  %117 = vmatpush.msra.mxu0 0.0
  %118 = vmatpush.msra.mxu0 0.0
  %119 = vmatpush.msra.mxu0 0.0
  %120 = vmatpush.msra.mxu0 0.0
  %121 = vmatpush.msra.mxu0 0.0
  %122 = vmatpush.msra.mxu0 0.0
  %123 = vmatpush.msra.mxu0 0.0
  %124 = vmatpush.msra.mxu0 0.0
  %125 = vmatpush.msra.mxu0 0.0
  %126 = vmatpush.msra.mxu0 0.0
  %127 = vmatpush.msra.mxu0 %v40
  %128 = vmatpush.msra.mxu0 %v38
  %129 = vmatmul.f32.gmra.mxu0 %v49
  %v130 = vpop.f32.mrf.mxu0
  %v131 = vadd.f32 %v44, %v130
  %132 = vmatmul.f32.gmra.mxu0 %v52
  %v133 = vpop.f32.mrf.mxu0
  %v134 = vadd.f32 %v44, %v133
  %135 = vmatmul.f32.gmra.mxu0 %v55
  %v136 = vpop.f32.mrf.mxu0
  %v137 = vadd.f32 %v44, %v136
  %138 = vmatmul.f32.gmra.mxu0 %v58
  %v139 = vpop.f32.mrf.mxu0
  %v140 = vadd.f32 %v44, %v139
  %141 = vmatmul.f32.gmra.mxu0 %v61
  %v142 = vpop.f32.mrf.mxu0
  %v143 = vadd.f32 %v44, %v142
  %144 = vmatmul.f32.gmra.mxu0 %v64
  %v145 = vpop.f32.mrf.mxu0
  %v146 = vadd.f32 %v44, %v145
  %147 = vmatmul.f32.gmra.mxu0 %v67
  %v148 = vpop.f32.mrf.mxu0
  %v149 = vadd.f32 %v44, %v148
  %150 = vmatmul.f32.gmra.mxu0 %v70
  %v151 = vpop.f32.mrf.mxu0
  %v152 = vadd.f32 %v44, %v151
  %153 = vdwg.mxu0
  %154 = vst [vmem:[#allocation2] sm:$0xff] %v90
  %155 = vst [vmem:[#allocation2 + $0x8] sm:$0xff] %v131
  %156 = vst [vmem:[#allocation2 + $0x10] sm:$0xff] %v93
  %157 = vst [vmem:[#allocation2 + $0x18] sm:$0xff] %v134
  %158 = vst [vmem:[#allocation2 + $0x20] sm:$0xff] %v96
  %159 = vst [vmem:[#allocation2 + $0x28] sm:$0xff] %v137
  %160 = vst [vmem:[#allocation2 + $0x30] sm:$0xff] %v99
  %161 = vst [vmem:[#allocation2 + $0x38] sm:$0xff] %v140
  %162 = vst [vmem:[#allocation2 + $0x40] sm:$0xff] %v102
  %163 = vst [vmem:[#allocation2 + $0x48] sm:$0xff] %v143
  %164 = vst [vmem:[#allocation2 + $0x50] sm:$0xff] %v105
  %165 = vst [vmem:[#allocation2 + $0x58] sm:$0xff] %v146
  %166 = vst [vmem:[#allocation2 + $0x60] sm:$0xff] %v108
  %167 = vst [vmem:[#allocation2 + $0x68] sm:$0xff] %v149
  %168 = vst [vmem:[#allocation2 + $0x70] sm:$0xff] %v111
  %169 = vst [vmem:[#allocation2 + $0x78] sm:$0xff] %v152
  %v170 = vld [vmem:[%s4] sm:$0xff]
  %v171 = vld [vmem:[%s4 + $0x8] sm:$0xff]
  %v172 = vld [vmem:[%s4 + $0x10] sm:$0xff]
  %v173 = vld [vmem:[%s4 + $0x18] sm:$0xff]
  %v174 = vld [vmem:[%s4 + $0x20] sm:$0xff]
  %v175 = vld [vmem:[%s4 + $0x28] sm:$0xff]
  %v176 = vld [vmem:[%s4 + $0x30] sm:$0xff]
  %v177 = vld [vmem:[%s4 + $0x38] sm:$0xff]
  %v178 = vld [vmem:[%s4 + $0x40] sm:$0xff]
  %v179 = vld [vmem:[%s4 + $0x48] sm:$0xff]
  %v180 = vld [vmem:[%s4 + $0x50] sm:$0xff]
  %v181 = vld [vmem:[%s4 + $0x58] sm:$0xff]
  %v182 = vld [vmem:[%s4 + $0x60] sm:$0xff]
  %v183 = vld [vmem:[%s4 + $0x68] sm:$0xff]
  %v184 = vld [vmem:[%s4 + $0x70] sm:$0xff]
  %v185 = vld [vmem:[%s4 + $0x78] sm:$0xff]
  %v186 = vld [vmem:[%s5] sm:$0x3]
  %v187 = vld [vmem:[%s1] sm:$0xff]
  %v188 = vld [vmem:[%s2] sm:$0xff]
  %v189 = vld [vmem:[#allocation2] sm:$0xff]
  %v190 = vld [vmem:[#allocation2 + $0x8] sm:$0xff]
  %vm191 = vcmask 523264
  %v193 = vsel %vm191, %v187, 0
  %195 = vmatpush.msra.mxu0 0.0
  %196 = vmatpush.msra.mxu0 0.0
  %197 = vmatpush.msra.mxu0 0.0
  %198 = vmatpush.msra.mxu0 0.0
  %199 = vmatpush.msra.mxu0 0.0
  %200 = vmatpush.msra.mxu0 0.0
  %201 = vmatpush.msra.mxu0 0.0
  %202 = vmatpush.msra.mxu0 0.0
  %203 = vmatpush.msra.mxu0 %v184
  %204 = vmatpush.msra.mxu0 %v182
  %205 = vmatpush.msra.mxu0 %v180
  %206 = vmatpush.msra.mxu0 %v178
  %207 = vmatpush.msra.mxu0 %v176
  %208 = vmatpush.msra.mxu0 %v174
  %209 = vmatpush.msra.mxu0 %v172
  %210 = vmatpush.msra.mxu0 %v170
  %211 = vmatmul.f32.gmra.mxu0 %v193
  %v212 = vpop.f32.mrf.mxu0
  %v213 = vadd.f32 %v189, %v212
  %214 = vdwg.mxu0
  %215 = vmatpush.msra.mxu0 0.0
  %216 = vmatpush.msra.mxu0 0.0
  %217 = vmatpush.msra.mxu0 0.0
  %218 = vmatpush.msra.mxu0 0.0
  %219 = vmatpush.msra.mxu0 0.0
  %220 = vmatpush.msra.mxu0 0.0
  %221 = vmatpush.msra.mxu0 0.0
  %222 = vmatpush.msra.mxu0 0.0
  %223 = vmatpush.msra.mxu0 %v185
  %224 = vmatpush.msra.mxu0 %v183
  %225 = vmatpush.msra.mxu0 %v181
  %226 = vmatpush.msra.mxu0 %v179
  %227 = vmatpush.msra.mxu0 %v177
  %228 = vmatpush.msra.mxu0 %v175
  %229 = vmatpush.msra.mxu0 %v173
  %230 = vmatpush.msra.mxu0 %v171
  %231 = vmatmul.f32.gmra.mxu0 %v193
  %v232 = vpop.f32.mrf.mxu0
  %v233 = vadd.f32 %v190, %v232
  %234 = vdwg.mxu0
  %v235 = vtanh.pop %v213
  %v236 = vtanh.pop %v233
  %v237 = vmul.f32 %v235, 0.5
  %v238 = vadd.f32 %v237, 0.5
  %v239 = vmul.f32 %v236, 0.5
  %v240 = vadd.f32 %v239, 0.5
  %242 = vrot.lane.b32.xlu0 %v188, 64
  %v243 = vpop.permute.xlu0 %242
  %v245 = vmul.f32 %v238, %v243
  %247 = vrot.lane.b32.xlu0 %v236, 64
  %v248 = vpop.permute.xlu0 %247
  %v250 = vmul.f32 %v238, %v248
  %252 = vrot.lane.b32.xlu0 %v250, 64
  %v253 = vpop.permute.xlu0 %252
  %v255 = vadd.f32 %v245, %v253
  %v256 = vtanh.pop %v255
  %258 = vrot.lane.b32.xlu0 %v256, 64
  %v259 = vpop.permute.xlu0 %258
  %v261 = vmul.f32 %v240, %v259
  %v262 = vlaneseq
  %v263 = vand.u32 %v262, 127
  %vm264 = vcmp.ge.s32.totalorder %v263, 0
  %vm265 = vcmp.lt.s32.totalorder %v263, 32
  %vm266 = vmand %vm264, %vm265
  %v267 = vsel %vm266, 1, 0
  %vm268 = vcmp.eq.s32.totalorder %v267, 1
  %v269 = vsel %vm268, %v261, %v187
  %271 = vrot.lane.b32.xlu0 %v255, 64
  %v272 = vpop.permute.xlu0 %271
  %v274 = vsel %vm268, %v272, %v188
  %v275 = vld [vmem:[#allocation2 + $0x10] sm:$0xff]
  %v276 = vld [vmem:[#allocation2 + $0x18] sm:$0xff]
  %v278 = vsel %vm191, %v269, 0
  %280 = vmatpush.msra.mxu0 0.0
  %281 = vmatpush.msra.mxu0 0.0
  %282 = vmatpush.msra.mxu0 0.0
  %283 = vmatpush.msra.mxu0 0.0
  %284 = vmatpush.msra.mxu0 0.0
  %285 = vmatpush.msra.mxu0 0.0
  %286 = vmatpush.msra.mxu0 0.0
  %287 = vmatpush.msra.mxu0 0.0
  %288 = vmatpush.msra.mxu0 %v184
  %289 = vmatpush.msra.mxu0 %v182
  %290 = vmatpush.msra.mxu0 %v180
  %291 = vmatpush.msra.mxu0 %v178
  %292 = vmatpush.msra.mxu0 %v176
  %293 = vmatpush.msra.mxu0 %v174
  %294 = vmatpush.msra.mxu0 %v172
  %295 = vmatpush.msra.mxu0 %v170
  %296 = vmatmul.f32.gmra.mxu0 %v278
  %v297 = vpop.f32.mrf.mxu0
  %v298 = vadd.f32 %v275, %v297
  %299 = vdwg.mxu0
  %300 = vmatpush.msra.mxu0 0.0
  %301 = vmatpush.msra.mxu0 0.0
  %302 = vmatpush.msra.mxu0 0.0
  %303 = vmatpush.msra.mxu0 0.0
  %304 = vmatpush.msra.mxu0 0.0
  %305 = vmatpush.msra.mxu0 0.0
  %306 = vmatpush.msra.mxu0 0.0
  %307 = vmatpush.msra.mxu0 0.0
  %308 = vmatpush.msra.mxu0 %v185
  %309 = vmatpush.msra.mxu0 %v183
  %310 = vmatpush.msra.mxu0 %v181
  %311 = vmatpush.msra.mxu0 %v179
  %312 = vmatpush.msra.mxu0 %v177
  %313 = vmatpush.msra.mxu0 %v175
  %314 = vmatpush.msra.mxu0 %v173
  %315 = vmatpush.msra.mxu0 %v171
  %316 = vmatmul.f32.gmra.mxu0 %v278
  %v317 = vpop.f32.mrf.mxu0
  %v318 = vadd.f32 %v276, %v317
  %319 = vdwg.mxu0
  %v320 = vtanh.pop %v298
  %v321 = vtanh.pop %v318
  %v322 = vmul.f32 %v320, 0.5
  %v323 = vadd.f32 %v322, 0.5
  %v324 = vmul.f32 %v321, 0.5
  %v325 = vadd.f32 %v324, 0.5
  %327 = vrot.lane.b32.xlu0 %v274, 64
  %v328 = vpop.permute.xlu0 %327
  %v330 = vmul.f32 %v323, %v328
  %332 = vrot.lane.b32.xlu0 %v321, 64
  %v333 = vpop.permute.xlu0 %332
  %v335 = vmul.f32 %v323, %v333
  %337 = vrot.lane.b32.xlu0 %v335, 64
  %v338 = vpop.permute.xlu0 %337
  %v340 = vadd.f32 %v330, %v338
  %v341 = vtanh.pop %v340
  %343 = vrot.lane.b32.xlu0 %v341, 64
  %v344 = vpop.permute.xlu0 %343
  %v346 = vmul.f32 %v325, %v344
  %v347 = vld [vmem:[#allocation2 + $0x20] sm:$0xff]
  %v348 = vld [vmem:[#allocation2 + $0x28] sm:$0xff]
  %v350 = vsel %vm191, %v346, 0
  %352 = vmatpush.msra.mxu0 0.0
  %353 = vmatpush.msra.mxu0 0.0
  %354 = vmatpush.msra.mxu0 0.0
  %355 = vmatpush.msra.mxu0 0.0
  %356 = vmatpush.msra.mxu0 0.0
  %357 = vmatpush.msra.mxu0 0.0
  %358 = vmatpush.msra.mxu0 0.0
  %359 = vmatpush.msra.mxu0 0.0
  %360 = vmatpush.msra.mxu0 %v184
  %361 = vmatpush.msra.mxu0 %v182
  %362 = vmatpush.msra.mxu0 %v180
  %363 = vmatpush.msra.mxu0 %v178
  %364 = vmatpush.msra.mxu0 %v176
  %365 = vmatpush.msra.mxu0 %v174
  %366 = vmatpush.msra.mxu0 %v172
  %367 = vmatpush.msra.mxu0 %v170
  %368 = vmatmul.f32.gmra.mxu0 %v350
  %v369 = vpop.f32.mrf.mxu0
  %v370 = vadd.f32 %v347, %v369
  %371 = vdwg.mxu0
  %372 = vmatpush.msra.mxu0 0.0
  %373 = vmatpush.msra.mxu0 0.0
  %374 = vmatpush.msra.mxu0 0.0
  %375 = vmatpush.msra.mxu0 0.0
  %376 = vmatpush.msra.mxu0 0.0
  %377 = vmatpush.msra.mxu0 0.0
  %378 = vmatpush.msra.mxu0 0.0
  %379 = vmatpush.msra.mxu0 0.0
  %380 = vmatpush.msra.mxu0 %v185
  %381 = vmatpush.msra.mxu0 %v183
  %382 = vmatpush.msra.mxu0 %v181
  %383 = vmatpush.msra.mxu0 %v179
  %384 = vmatpush.msra.mxu0 %v177
  %385 = vmatpush.msra.mxu0 %v175
  %386 = vmatpush.msra.mxu0 %v173
  %387 = vmatpush.msra.mxu0 %v171
  %388 = vmatmul.f32.gmra.mxu0 %v350
  %v389 = vpop.f32.mrf.mxu0
  %v390 = vadd.f32 %v348, %v389
  %391 = vdwg.mxu0
  %v392 = vtanh.pop %v370
  %v393 = vtanh.pop %v390
  %v394 = vmul.f32 %v392, 0.5
  %v395 = vadd.f32 %v394, 0.5
  %v396 = vmul.f32 %v393, 0.5
  %v397 = vadd.f32 %v396, 0.5
  %v398 = vmul.f32 %v395, %v340
  %400 = vrot.lane.b32.xlu0 %v393, 64
  %v401 = vpop.permute.xlu0 %400
  %v403 = vmul.f32 %v395, %v401
  %405 = vrot.lane.b32.xlu0 %v403, 64
  %v406 = vpop.permute.xlu0 %405
  %v408 = vadd.f32 %v398, %v406
  %v409 = vtanh.pop %v408
  %411 = vrot.lane.b32.xlu0 %v409, 64
  %v412 = vpop.permute.xlu0 %411
  %v414 = vmul.f32 %v397, %v412
  %v415 = vld [vmem:[#allocation2 + $0x30] sm:$0xff]
  %v416 = vld [vmem:[#allocation2 + $0x38] sm:$0xff]
  %v418 = vsel %vm191, %v414, 0
  %420 = vmatpush.msra.mxu0 0.0
  %421 = vmatpush.msra.mxu0 0.0
  %422 = vmatpush.msra.mxu0 0.0
  %423 = vmatpush.msra.mxu0 0.0
  %424 = vmatpush.msra.mxu0 0.0
  %425 = vmatpush.msra.mxu0 0.0
  %426 = vmatpush.msra.mxu0 0.0
  %427 = vmatpush.msra.mxu0 0.0
  %428 = vmatpush.msra.mxu0 %v184
  %429 = vmatpush.msra.mxu0 %v182
  %430 = vmatpush.msra.mxu0 %v180
  %431 = vmatpush.msra.mxu0 %v178
  %432 = vmatpush.msra.mxu0 %v176
  %433 = vmatpush.msra.mxu0 %v174
  %434 = vmatpush.msra.mxu0 %v172
  %435 = vmatpush.msra.mxu0 %v170
  %436 = vmatmul.f32.gmra.mxu0 %v418
  %v437 = vpop.f32.mrf.mxu0
  %v438 = vadd.f32 %v415, %v437
  %439 = vdwg.mxu0
  %440 = vmatpush.msra.mxu0 0.0
  %441 = vmatpush.msra.mxu0 0.0
  %442 = vmatpush.msra.mxu0 0.0
  %443 = vmatpush.msra.mxu0 0.0
  %444 = vmatpush.msra.mxu0 0.0
  %445 = vmatpush.msra.mxu0 0.0
  %446 = vmatpush.msra.mxu0 0.0
  %447 = vmatpush.msra.mxu0 0.0
  %448 = vmatpush.msra.mxu0 %v185
  %449 = vmatpush.msra.mxu0 %v183
  %450 = vmatpush.msra.mxu0 %v181
  %451 = vmatpush.msra.mxu0 %v179
  %452 = vmatpush.msra.mxu0 %v177
  %453 = vmatpush.msra.mxu0 %v175
  %454 = vmatpush.msra.mxu0 %v173
  %455 = vmatpush.msra.mxu0 %v171
  %456 = vmatmul.f32.gmra.mxu0 %v418
  %v457 = vpop.f32.mrf.mxu0
  %v458 = vadd.f32 %v416, %v457
  %459 = vdwg.mxu0
  %v460 = vtanh.pop %v438
  %v461 = vtanh.pop %v458
  %v462 = vmul.f32 %v460, 0.5
  %v463 = vadd.f32 %v462, 0.5
  %v464 = vmul.f32 %v461, 0.5
  %v465 = vadd.f32 %v464, 0.5
  %v466 = vmul.f32 %v463, %v408
  %468 = vrot.lane.b32.xlu0 %v461, 64
  %v469 = vpop.permute.xlu0 %468
  %v471 = vmul.f32 %v463, %v469
  %473 = vrot.lane.b32.xlu0 %v471, 64
  %v474 = vpop.permute.xlu0 %473
  %v476 = vadd.f32 %v466, %v474
  %v477 = vtanh.pop %v476
  %479 = vrot.lane.b32.xlu0 %v477, 64
  %v480 = vpop.permute.xlu0 %479
  %v482 = vmul.f32 %v465, %v480
  %v483 = vld [vmem:[#allocation2 + $0x40] sm:$0xff]
  %v484 = vld [vmem:[#allocation2 + $0x48] sm:$0xff]
  %v486 = vsel %vm191, %v482, 0
  %488 = vmatpush.msra.mxu0 0.0
  %489 = vmatpush.msra.mxu0 0.0
  %490 = vmatpush.msra.mxu0 0.0
  %491 = vmatpush.msra.mxu0 0.0
  %492 = vmatpush.msra.mxu0 0.0
  %493 = vmatpush.msra.mxu0 0.0
  %494 = vmatpush.msra.mxu0 0.0
  %495 = vmatpush.msra.mxu0 0.0
  %496 = vmatpush.msra.mxu0 %v184
  %497 = vmatpush.msra.mxu0 %v182
  %498 = vmatpush.msra.mxu0 %v180
  %499 = vmatpush.msra.mxu0 %v178
  %500 = vmatpush.msra.mxu0 %v176
  %501 = vmatpush.msra.mxu0 %v174
  %502 = vmatpush.msra.mxu0 %v172
  %503 = vmatpush.msra.mxu0 %v170
  %504 = vmatmul.f32.gmra.mxu0 %v486
  %v505 = vpop.f32.mrf.mxu0
  %v506 = vadd.f32 %v483, %v505
  %507 = vdwg.mxu0
  %508 = vmatpush.msra.mxu0 0.0
  %509 = vmatpush.msra.mxu0 0.0
  %510 = vmatpush.msra.mxu0 0.0
  %511 = vmatpush.msra.mxu0 0.0
  %512 = vmatpush.msra.mxu0 0.0
  %513 = vmatpush.msra.mxu0 0.0
  %514 = vmatpush.msra.mxu0 0.0
  %515 = vmatpush.msra.mxu0 0.0
  %516 = vmatpush.msra.mxu0 %v185
  %517 = vmatpush.msra.mxu0 %v183
  %518 = vmatpush.msra.mxu0 %v181
  %519 = vmatpush.msra.mxu0 %v179
  %520 = vmatpush.msra.mxu0 %v177
  %521 = vmatpush.msra.mxu0 %v175
  %522 = vmatpush.msra.mxu0 %v173
  %523 = vmatpush.msra.mxu0 %v171
  %524 = vmatmul.f32.gmra.mxu0 %v486
  %v525 = vpop.f32.mrf.mxu0
  %v526 = vadd.f32 %v484, %v525
  %527 = vdwg.mxu0
  %v528 = vtanh.pop %v506
  %v529 = vtanh.pop %v526
  %v530 = vmul.f32 %v528, 0.5
  %v531 = vadd.f32 %v530, 0.5
  %v532 = vmul.f32 %v529, 0.5
  %v533 = vadd.f32 %v532, 0.5
  %v534 = vmul.f32 %v531, %v476
  %536 = vrot.lane.b32.xlu0 %v529, 64
  %v537 = vpop.permute.xlu0 %536
  %v539 = vmul.f32 %v531, %v537
  %541 = vrot.lane.b32.xlu0 %v539, 64
  %v542 = vpop.permute.xlu0 %541
  %v544 = vadd.f32 %v534, %v542
  %v545 = vtanh.pop %v544
  %547 = vrot.lane.b32.xlu0 %v545, 64
  %v548 = vpop.permute.xlu0 %547
  %v550 = vmul.f32 %v533, %v548
  %v551 = vld [vmem:[#allocation2 + $0x50] sm:$0xff]
  %v552 = vld [vmem:[#allocation2 + $0x58] sm:$0xff]
  %v554 = vsel %vm191, %v550, 0
  %556 = vmatpush.msra.mxu0 0.0
  %557 = vmatpush.msra.mxu0 0.0
  %558 = vmatpush.msra.mxu0 0.0
  %559 = vmatpush.msra.mxu0 0.0
  %560 = vmatpush.msra.mxu0 0.0
  %561 = vmatpush.msra.mxu0 0.0
  %562 = vmatpush.msra.mxu0 0.0
  %563 = vmatpush.msra.mxu0 0.0
  %564 = vmatpush.msra.mxu0 %v184
  %565 = vmatpush.msra.mxu0 %v182
  %566 = vmatpush.msra.mxu0 %v180
  %567 = vmatpush.msra.mxu0 %v178
  %568 = vmatpush.msra.mxu0 %v176
  %569 = vmatpush.msra.mxu0 %v174
  %570 = vmatpush.msra.mxu0 %v172
  %571 = vmatpush.msra.mxu0 %v170
  %572 = vmatmul.f32.gmra.mxu0 %v554
  %v573 = vpop.f32.mrf.mxu0
  %v574 = vadd.f32 %v551, %v573
  %575 = vdwg.mxu0
  %576 = vmatpush.msra.mxu0 0.0
  %577 = vmatpush.msra.mxu0 0.0
  %578 = vmatpush.msra.mxu0 0.0
  %579 = vmatpush.msra.mxu0 0.0
  %580 = vmatpush.msra.mxu0 0.0
  %581 = vmatpush.msra.mxu0 0.0
  %582 = vmatpush.msra.mxu0 0.0
  %583 = vmatpush.msra.mxu0 0.0
  %584 = vmatpush.msra.mxu0 %v185
  %585 = vmatpush.msra.mxu0 %v183
  %586 = vmatpush.msra.mxu0 %v181
  %587 = vmatpush.msra.mxu0 %v179
  %588 = vmatpush.msra.mxu0 %v177
  %589 = vmatpush.msra.mxu0 %v175
  %590 = vmatpush.msra.mxu0 %v173
  %591 = vmatpush.msra.mxu0 %v171
  %592 = vmatmul.f32.gmra.mxu0 %v554
  %v593 = vpop.f32.mrf.mxu0
  %v594 = vadd.f32 %v552, %v593
  %595 = vdwg.mxu0
  %v596 = vtanh.pop %v574
  %v597 = vtanh.pop %v594
  %v598 = vmul.f32 %v596, 0.5
  %v599 = vadd.f32 %v598, 0.5
  %v600 = vmul.f32 %v597, 0.5
  %v601 = vadd.f32 %v600, 0.5
  %v602 = vmul.f32 %v599, %v544
  %604 = vrot.lane.b32.xlu0 %v597, 64
  %v605 = vpop.permute.xlu0 %604
  %v607 = vmul.f32 %v599, %v605
  %609 = vrot.lane.b32.xlu0 %v607, 64
  %v610 = vpop.permute.xlu0 %609
  %v612 = vadd.f32 %v602, %v610
  %v613 = vtanh.pop %v612
  %615 = vrot.lane.b32.xlu0 %v613, 64
  %v616 = vpop.permute.xlu0 %615
  %v618 = vmul.f32 %v601, %v616
  %v619 = vld [vmem:[#allocation2 + $0x60] sm:$0xff]
  %v620 = vld [vmem:[#allocation2 + $0x68] sm:$0xff]
  %v622 = vsel %vm191, %v618, 0
  %624 = vmatpush.msra.mxu0 0.0
  %625 = vmatpush.msra.mxu0 0.0
  %626 = vmatpush.msra.mxu0 0.0
  %627 = vmatpush.msra.mxu0 0.0
  %628 = vmatpush.msra.mxu0 0.0
  %629 = vmatpush.msra.mxu0 0.0
  %630 = vmatpush.msra.mxu0 0.0
  %631 = vmatpush.msra.mxu0 0.0
  %632 = vmatpush.msra.mxu0 %v184
  %633 = vmatpush.msra.mxu0 %v182
  %634 = vmatpush.msra.mxu0 %v180
  %635 = vmatpush.msra.mxu0 %v178
  %636 = vmatpush.msra.mxu0 %v176
  %637 = vmatpush.msra.mxu0 %v174
  %638 = vmatpush.msra.mxu0 %v172
  %639 = vmatpush.msra.mxu0 %v170
  %640 = vmatmul.f32.gmra.mxu0 %v622
  %v641 = vpop.f32.mrf.mxu0
  %v642 = vadd.f32 %v619, %v641
  %643 = vdwg.mxu0
  %644 = vmatpush.msra.mxu0 0.0
  %645 = vmatpush.msra.mxu0 0.0
  %646 = vmatpush.msra.mxu0 0.0
  %647 = vmatpush.msra.mxu0 0.0
  %648 = vmatpush.msra.mxu0 0.0
  %649 = vmatpush.msra.mxu0 0.0
  %650 = vmatpush.msra.mxu0 0.0
  %651 = vmatpush.msra.mxu0 0.0
  %652 = vmatpush.msra.mxu0 %v185
  %653 = vmatpush.msra.mxu0 %v183
  %654 = vmatpush.msra.mxu0 %v181
  %655 = vmatpush.msra.mxu0 %v179
  %656 = vmatpush.msra.mxu0 %v177
  %657 = vmatpush.msra.mxu0 %v175
  %658 = vmatpush.msra.mxu0 %v173
  %659 = vmatpush.msra.mxu0 %v171
  %660 = vmatmul.f32.gmra.mxu0 %v622
  %v661 = vpop.f32.mrf.mxu0
  %v662 = vadd.f32 %v620, %v661
  %663 = vdwg.mxu0
  %v664 = vtanh.pop %v642
  %v665 = vtanh.pop %v662
  %v666 = vmul.f32 %v664, 0.5
  %v667 = vadd.f32 %v666, 0.5
  %v668 = vmul.f32 %v665, 0.5
  %v669 = vadd.f32 %v668, 0.5
  %v670 = vmul.f32 %v667, %v612
  %672 = vrot.lane.b32.xlu0 %v665, 64
  %v673 = vpop.permute.xlu0 %672
  %v675 = vmul.f32 %v667, %v673
  %677 = vrot.lane.b32.xlu0 %v675, 64
  %v678 = vpop.permute.xlu0 %677
  %v680 = vadd.f32 %v670, %v678
  %v681 = vtanh.pop %v680
  %683 = vrot.lane.b32.xlu0 %v681, 64
  %v684 = vpop.permute.xlu0 %683
  %v686 = vmul.f32 %v669, %v684
  %v687 = vld [vmem:[#allocation2 + $0x70] sm:$0xff]
  %v688 = vld [vmem:[#allocation2 + $0x78] sm:$0xff]
  %v690 = vsel %vm191, %v686, 0
  %692 = vmatpush.msra.mxu0 0.0
  %693 = vmatpush.msra.mxu0 0.0
  %694 = vmatpush.msra.mxu0 0.0
  %695 = vmatpush.msra.mxu0 0.0
  %696 = vmatpush.msra.mxu0 0.0
  %697 = vmatpush.msra.mxu0 0.0
  %698 = vmatpush.msra.mxu0 0.0
  %699 = vmatpush.msra.mxu0 0.0
  %700 = vmatpush.msra.mxu0 %v184
  %701 = vmatpush.msra.mxu0 %v182
  %702 = vmatpush.msra.mxu0 %v180
  %703 = vmatpush.msra.mxu0 %v178
  %704 = vmatpush.msra.mxu0 %v176
  %705 = vmatpush.msra.mxu0 %v174
  %706 = vmatpush.msra.mxu0 %v172
  %707 = vmatpush.msra.mxu0 %v170
  %708 = vmatmul.f32.gmra.mxu0 %v690
  %v709 = vpop.f32.mrf.mxu0
  %v710 = vadd.f32 %v687, %v709
  %711 = vdwg.mxu0
  %712 = vmatpush.msra.mxu0 0.0
  %713 = vmatpush.msra.mxu0 0.0
  %714 = vmatpush.msra.mxu0 0.0
  %715 = vmatpush.msra.mxu0 0.0
  %716 = vmatpush.msra.mxu0 0.0
  %717 = vmatpush.msra.mxu0 0.0
  %718 = vmatpush.msra.mxu0 0.0
  %719 = vmatpush.msra.mxu0 0.0
  %720 = vmatpush.msra.mxu0 %v185
  %721 = vmatpush.msra.mxu0 %v183
  %722 = vmatpush.msra.mxu0 %v181
  %723 = vmatpush.msra.mxu0 %v179
  %724 = vmatpush.msra.mxu0 %v177
  %725 = vmatpush.msra.mxu0 %v175
  %726 = vmatpush.msra.mxu0 %v173
  %727 = vmatpush.msra.mxu0 %v171
  %728 = vmatmul.f32.gmra.mxu0 %v690
  %v729 = vpop.f32.mrf.mxu0
  %v730 = vadd.f32 %v688, %v729
  %731 = vdwg.mxu0
  %v732 = vtanh.pop %v710
  %v733 = vtanh.pop %v730
  %v734 = vmul.f32 %v732, 0.5
  %v735 = vadd.f32 %v734, 0.5
  %v736 = vmul.f32 %v733, 0.5
  %v737 = vadd.f32 %v736, 0.5
  %v738 = vmul.f32 %v735, %v680
  %740 = vrot.lane.b32.xlu0 %v733, 64
  %v741 = vpop.permute.xlu0 %740
  %v743 = vmul.f32 %v735, %v741
  %745 = vrot.lane.b32.xlu0 %v743, 64
  %v746 = vpop.permute.xlu0 %745
  %v748 = vadd.f32 %v738, %v746
  %v749 = vtanh.pop %v748
  %751 = vrot.lane.b32.xlu0 %v749, 64
  %v752 = vpop.permute.xlu0 %751
  %v754 = vmul.f32 %v737, %v752
  %v756 = vperm.slane %v186, 0
  %v757 = vperm.slane %v186, 1
  %v761 = vsel %vm191, %v754, 0
  %763 = vmatpush.msra.mxu0 0.0
  %764 = vmatpush.msra.mxu0 0.0
  %765 = vmatpush.msra.mxu0 0.0
  %766 = vmatpush.msra.mxu0 0.0
  %767 = vmatpush.msra.mxu0 0.0
  %768 = vmatpush.msra.mxu0 0.0
  %769 = vmatpush.msra.mxu0 0.0
  %770 = vmatpush.msra.mxu0 0.0
  %771 = vmatpush.msra.mxu0 %v184
  %772 = vmatpush.msra.mxu0 %v182
  %773 = vmatpush.msra.mxu0 %v180
  %774 = vmatpush.msra.mxu0 %v178
  %775 = vmatpush.msra.mxu0 %v176
  %776 = vmatpush.msra.mxu0 %v174
  %777 = vmatpush.msra.mxu0 %v172
  %778 = vmatpush.msra.mxu0 %v170
  %779 = vmatmul.f32.gmra.mxu0 %v761
  %v780 = vpop.f32.mrf.mxu0
  %v781 = vadd.f32 %v756, %v780
  %782 = vdwg.mxu0
  %783 = vmatpush.msra.mxu0 0.0
  %784 = vmatpush.msra.mxu0 0.0
  %785 = vmatpush.msra.mxu0 0.0
  %786 = vmatpush.msra.mxu0 0.0
  %787 = vmatpush.msra.mxu0 0.0
  %788 = vmatpush.msra.mxu0 0.0
  %789 = vmatpush.msra.mxu0 0.0
  %790 = vmatpush.msra.mxu0 0.0
  %791 = vmatpush.msra.mxu0 %v185
  %792 = vmatpush.msra.mxu0 %v183
  %793 = vmatpush.msra.mxu0 %v181
  %794 = vmatpush.msra.mxu0 %v179
  %795 = vmatpush.msra.mxu0 %v177
  %796 = vmatpush.msra.mxu0 %v175
  %797 = vmatpush.msra.mxu0 %v173
  %798 = vmatpush.msra.mxu0 %v171
  %799 = vmatmul.f32.gmra.mxu0 %v761
  %v800 = vpop.f32.mrf.mxu0
  %v801 = vadd.f32 %v757, %v800
  %802 = vdwg.mxu0
  %v803 = vtanh.pop %v781
  %v804 = vtanh.pop %v801
  %v805 = vmul.f32 %v803, 0.5
  %v806 = vadd.f32 %v805, 0.5
  %v807 = vmul.f32 %v804, 0.5
  %v808 = vadd.f32 %v807, 0.5
  %v809 = vmul.f32 %v806, %v748
  %811 = vrot.lane.b32.xlu0 %v804, 64
  %v812 = vpop.permute.xlu0 %811
  %v814 = vmul.f32 %v806, %v812
  %816 = vrot.lane.b32.xlu0 %v814, 64
  %v817 = vpop.permute.xlu0 %816
  %v819 = vadd.f32 %v809, %v817
  %v820 = vtanh.pop %v819
  %822 = vrot.lane.b32.xlu0 %v820, 64
  %v823 = vpop.permute.xlu0 %822
  %v825 = vmul.f32 %v808, %v823
  %vm826 = vcmp.ge.s32.totalorder %v263, 32
  %vm827 = vcmp.lt.s32.totalorder %v263, 64
  %vm828 = vmand %vm826, %vm827
  %v829 = vsel %vm828, 1, 0
  %vm830 = vcmp.eq.s32.totalorder %v829, 1
  %v831 = vsel %vm830, %v825, %v754
  %v832 = vld [vmem:[%s6] sm:$0xff]
  %v833 = vld [vmem:[%s6 + $0x8] sm:$0xff]
  %v834 = vld [vmem:[%s6 + $0x10] sm:$0xff]
  %v835 = vld [vmem:[%s6 + $0x18] sm:$0xff]
  %v836 = vld [vmem:[%s7] sm:$0x1]
  %v838 = vperm.slane %v836, 0
  %841 = vrot.lane.b32.xlu0 %v831, 96
  %v842 = vpop.permute.xlu0 %841
  %vm843 = vcmask 261120
  %v844 = vsel %vm843, %v842, 0
  %846 = vmatpush.msra.mxu0 0.0
  %847 = vmatpush.msra.mxu0 0.0
  %848 = vmatpush.msra.mxu0 0.0
  %849 = vmatpush.msra.mxu0 0.0
  %850 = vmatpush.msra.mxu0 0.0
  %851 = vmatpush.msra.mxu0 0.0
  %852 = vmatpush.msra.mxu0 0.0
  %853 = vmatpush.msra.mxu0 0.0
  %854 = vmatpush.msra.mxu0 0.0
  %855 = vmatpush.msra.mxu0 0.0
  %856 = vmatpush.msra.mxu0 0.0
  %857 = vmatpush.msra.mxu0 0.0
  %858 = vmatpush.msra.mxu0 %v835
  %859 = vmatpush.msra.mxu0 %v834
  %860 = vmatpush.msra.mxu0 %v833
  %861 = vmatpush.msra.mxu0 %v832
  %862 = vmatmul.f32.gmra.mxu0 %v844
  %v863 = vpop.f32.mrf.mxu0
  %v864 = vadd.f32 %v838, %v863
  %865 = vdwg.mxu0
  %vm866 = vcmask 64512
  %867 = vst.msk [vmem:[%s8] sm:$0xff] %vm866, %v864
  // Predicated region
  $region34: #{lstm_model3_forward.1} parent=0 // pred_check
    _
  $region35: #{lstm_model3_forward.1} parent=0 // pred_check_branch
    %869 = sbr.rel (0) target = $region37
  $region36: #{lstm_model3_forward.1} parent=0 // pred_region
    _
  $region37: #{lstm_model3_forward.1} parent=0 // pred_fallthru
    _
  // Predicated region
  $region38: #{lstm_model3_forward.1} parent=0 // pred_check
    _
  $region39: #{lstm_model3_forward.1} parent=0 // pred_check_branch
    %871 = sbr.rel (0) target = $region41
  $region40: #{lstm_model3_forward.1} parent=0 // pred_region
    _
  $region41: #{lstm_model3_forward.1} parent=0 // pred_fallthru
    _

</llo_original>
